<compile_context>
chip_gen: v7x
topology: tpu7x:2x2x1
jax: 0.10.0
libtpu: 0.0.40
codegen_flags: <defaults>
</compile_context>

<pallas_src>
import functools

import jax
import jax.numpy as jnp
from jax.experimental import pallas as pl
from jax.experimental.pallas import tpu as pltpu


def _round_up(v, m):
    return ((v + m - 1) // m) * m


def _pick_tiling(C, N):
    """Adaptive lane tile and per-call VMEM budget from the chip's VMEM size."""
    try:
        vmem_cap = int(pltpu.get_tpu_info().vmem_capacity_bytes)
    except Exception:
        vmem_cap = 64 * 1024 * 1024  # conservative fallback: v7x per-core VMEM
    # Pass 2 keeps ~4 (1, C, tn) f32 blocks live (double-buffered in + out);
    # target a block of ~VMEM/8 (8 MiB on v7x, 16 MiB on v5e/v6e), at least
    # 2 MiB so the ~0.35us per-grid-step overhead amortizes, clamped to N.
    block_bytes = max(2 << 20, vmem_cap // 8)
    tn = _round_up(max(block_bytes // (4 * C), 128), 128)
    tn = min(tn, _round_up(N, 128))
    vmem_limit = vmem_cap * 3 // 4          # 48 MiB on v7x, 96 MiB on v5e/v6e
    return tn, vmem_limit


# ---------------------------------------------------------------------------
# Pass 1: streaming global-context reduction (online softmax) + gate epilogue
# ---------------------------------------------------------------------------
def _reduce_kernel(x_ref,       # (1, C, TN) VMEM block of flattened input
                   w_mask_ref,  # (1, C)   conv_mask weight (row)
                   b_mask_ref,  # (1,)     conv_mask bias (SMEM scalar)
                   w1t_ref,     # (C, P)   first 1x1 conv weight, transposed
                   b1_ref,      # (1, P)
                   ln_g_ref,    # (1, P)   LayerNorm gamma
                   ln_b_ref,    # (1, P)   LayerNorm beta
                   w2_ref,      # (C, P)   second 1x1 conv weight
                   b2_ref,      # (1, C)
                   gate_ref,    # (1, 1, C) output: per-channel 1 + sigmoid(.)
                   m_sc,        # (1, 1) VMEM scratch: running max
                   s_sc,        # (1, 1) VMEM scratch: running sum
                   ctx_sc,      # (1, C) VMEM scratch: lane-major context acc
                   *, n_valid, tn):
    n = pl.program_id(1)
    last = pl.num_programs(1) - 1
    rem = n_valid % tn          # static: nonzero only if the last tile is ragged

    @pl.when(n == 0)
    def _():
        m_sc[...] = jnp.full_like(m_sc, -jnp.inf)
        s_sc[...] = jnp.zeros_like(s_sc)
        ctx_sc[...] = jnp.zeros_like(ctx_sc)

    if rem:
        col = jax.lax.broadcasted_iota(jnp.int32, (1, tn), 1)

        # The partial last block's out-of-range columns are not overwritten by
        # the DMA and may hold NaN/Inf garbage, which would poison the MXU
        # contraction via 0 * NaN.  Zero them; runtime cost confined to the
        # last tile only.
        @pl.when(n == last)
        def _():
            x_ref[0] = jnp.where(col < rem, x_ref[0], 0.0)

    xb = x_ref[0]                                                   # (C, TN)

    # conv_mask logits on the MXU: (1, C) @ (C, TN) -> (1, TN)
    logits = jax.lax.dot_general(
        w_mask_ref[...], xb, (((1,), (0,)), ((), ())),
        preferred_element_type=jnp.float32) + b_mask_ref[0]

    if rem:
        # Exclude padded columns from the softmax stats (no-op off last tile).
        logits = jnp.where(col + n * tn < n_valid, logits, -jnp.inf)

    # Online-softmax statistics (only the final C-vector gets normalized).
    m_prev = m_sc[...]                                              # (1, 1)
    m_new = jnp.maximum(m_prev, jnp.max(logits, axis=-1, keepdims=True))
    alpha = jnp.exp(m_prev - m_new)                                 # (1, 1)
    e = jnp.exp(logits - m_new)                                     # (1, TN)
    s_sc[...] = alpha * s_sc[...] + jnp.sum(e, axis=-1, keepdims=True)

    # Context accumulation on the MXU, lane-major: (1, TN) x (C, TN) -> (1, C)
    ctx_t = jax.lax.dot_general(
        e, xb, (((1,), (1,)), ((), ())),
        preferred_element_type=jnp.float32)                         # (1, C)
    ctx_sc[...] = alpha * ctx_sc[...] + ctx_t
    m_sc[...] = m_new

    @pl.when(n == last)
    def _():
        # Normalize the C-sized context once (not the whole (1, N) row).
        ctx = ctx_sc[...] * pl.reciprocal(s_sc[...], approx=False)  # (1, C)

        # channel_mul_conv: Conv1x1(C->P) -> LayerNorm(P) -> ReLU -> Conv1x1(P->C)
        h = jax.lax.dot_general(ctx, w1t_ref[...], (((1,), (0,)), ((), ())),
                                preferred_element_type=jnp.float32) + b1_ref[...]
        mu = jnp.mean(h, axis=-1, keepdims=True)
        var = jnp.mean((h - mu) ** 2, axis=-1, keepdims=True)
        h = (h - mu) * jax.lax.rsqrt(var + 1e-5) * ln_g_ref[...] + ln_b_ref[...]
        h = jnp.maximum(h, 0.0)
        t = jax.lax.dot_general(h, w2_ref[...], (((1,), (1,)), ((), ())),
                                preferred_element_type=jnp.float32) + b2_ref[...]
        # Pre-fuse the "+1" so pass 2 is a single multiply.
        gate_ref[0] = 1.0 + jax.nn.sigmoid(t)                       # (1, C)


# ---------------------------------------------------------------------------
# Pass 2: fully parallel gate application:  out = x * gate   (gate = 1+sigmoid)
# ---------------------------------------------------------------------------
def _apply_kernel(x_ref, gate_ref, o_ref):
    o_ref[...] = (x_ref[...] * gate_ref[...]).astype(o_ref.dtype)


@functools.partial(jax.jit, static_argnames=("tn",))
def context_block(x, params, *, tn=None):
    """x: (B, C, D, H, W) float32. Returns the same shape."""
    B, C, D, H, W = x.shape
    N = D * H * W
    P = params["w1_t"].shape[1]

    auto_tn, vmem_limit = _pick_tiling(C, N)
    if tn is None:
        tn = auto_tn
    else:
        tn = min(_round_up(max(tn, 128), 128), _round_up(N, 128))
    num_tiles = -(-N // tn)

    # Pure metadata reshape: no copy, no padding, no final slice.
    x2 = x.reshape(B, C, N)

    # ---- Pass 1: global context + channel gate ------------------------------
    gate = pl.pallas_call(
        functools.partial(_reduce_kernel, n_valid=N, tn=tn),
        out_shape=jax.ShapeDtypeStruct((B, 1, C), jnp.float32),
        grid=(B, num_tiles),
        in_specs=[
            pl.BlockSpec((1, C, tn), lambda b, n: (b, 0, n)),          # x
            pl.BlockSpec((1, C), lambda b, n: (0, 0)),                 # w_mask
            pl.BlockSpec(memory_space=pltpu.MemorySpace.SMEM),         # b_mask
            pl.BlockSpec((C, P), lambda b, n: (0, 0)),                 # w1_t
            pl.BlockSpec((1, P), lambda b, n: (0, 0)),                 # b1
            pl.BlockSpec((1, P), lambda b, n: (0, 0)),                 # ln_g
            pl.BlockSpec((1, P), lambda b, n: (0, 0)),                 # ln_b
            pl.BlockSpec((C, P), lambda b, n: (0, 0)),                 # w2
            pl.BlockSpec((1, C), lambda b, n: (0, 0)),                 # b2
        ],
        out_specs=pl.BlockSpec((1, 1, C), lambda b, n: (b, 0, 0)),
        scratch_shapes=[
            pltpu.VMEM((1, 1), jnp.float32),   # running max
            pltpu.VMEM((1, 1), jnp.float32),   # running sum
            pltpu.VMEM((1, C), jnp.float32),   # lane-major context accumulator
        ],
        compiler_params=pltpu.CompilerParams(
            dimension_semantics=("parallel", "arbitrary"),
            vmem_limit_bytes=vmem_limit),
        cost_estimate=pl.CostEstimate(
            flops=4 * B * C * N,
            transcendentals=B * N,
            bytes_accessed=4 * B * C * N + 4 * B * C),
    )(x2, params["w_mask"], params["b_mask"], params["w1_t"], params["b1"],
      params["ln_g"], params["ln_b"], params["w2"], params["b2"])

    # (B, 1, C) -> (B, C, 1): identical linear layout, free bitcast in XLA.
    gate_c1 = gate.reshape(B, C, 1)

    # ---- Pass 2: apply the channel gate -------------------------------------
    # No input_output_aliases: x is not donated, so aliasing would force a
    # defensive copy (an extra full HBM pass over x).
    out = pl.pallas_call(
        _apply_kernel,
        out_shape=jax.ShapeDtypeStruct((B, C, N), x2.dtype),
        grid=(B, num_tiles),
        in_specs=[
            pl.BlockSpec((1, C, tn), lambda b, n: (b, 0, n)),          # x
            pl.BlockSpec((1, C, 1), lambda b, n: (b, 0, 0)),           # gate
        ],
        out_specs=pl.BlockSpec((1, C, tn), lambda b, n: (b, 0, n)),
        compiler_params=pltpu.CompilerParams(
            dimension_semantics=("parallel", "parallel"),
            vmem_limit_bytes=vmem_limit),
        cost_estimate=pl.CostEstimate(
            flops=B * C * N,
            transcendentals=0,
            bytes_accessed=8 * B * C * N),
    )(x2, gate_c1)

    return out.reshape(B, C, D, H, W)


# ---------------------------------------------------------------------------
# Pure-JAX reference mirroring the PyTorch forward (channel_mul fusion only)
# ---------------------------------------------------------------------------
def reference(x, params):
    B, C, D, H, W = x.shape
    N = D * H * W
    xf = x.reshape(B, C, N)
    logits = jnp.einsum("bcn,c->bn", xf, params["w_mask"][0]) + params["b_mask"][0]
    attn = jax.nn.softmax(logits, axis=-1)
    ctx = jnp.einsum("bcn,bn->bc", xf, attn)                        # (B, C)
    h = ctx @ params["w1_t"] + params["b1"][0]                      # (B, P)
    mu = h.mean(-1, keepdims=True)
    var = ((h - mu) ** 2).mean(-1, keepdims=True)
    h = (h - mu) / jnp.sqrt(var + 1e-5) * params["ln_g"][0] + params["ln_b"][0]
    h = jnp.maximum(h, 0.0)
    t = h @ params["w2"].T + params["b2"][0]                        # (B, C)
    gate = jax.nn.sigmoid(t)
    out = xf * (1.0 + gate[:, :, None])
    return out.reshape(B, C, D, H, W)


if __name__ == "__main__":
    # Small shapes consistent with the module: inplanes=8, ratio=0.25 -> planes=2.
    B, C = 2, 8
    ratio = 0.25
    P = int(C * ratio)

    key = jax.random.PRNGKey(0)
    ks = jax.random.split(key, 10)

    # Deterministic synthetic parameters (1x1x1 conv kernels flattened).
    # NOTE: the module's reset_parameters() zero-inits the *last* conv; we use
    # nonzero deterministic values so the full compute path is exercised —
    # forward semantics are identical.
    params = dict(
        w_mask=jax.random.normal(ks[1], (1, C), jnp.float32) * 0.5,   # conv_mask weight
        b_mask=jnp.array([0.3], jnp.float32),                         # conv_mask bias
        w1_t=jax.random.normal(ks[2], (C, P), jnp.float32) * 0.5,     # conv1 weight^T
        b1=jax.random.normal(ks[3], (1, P), jnp.float32) * 0.1,
        ln_g=1.0 + 0.1 * jax.random.normal(ks[4], (1, P), jnp.float32),
        ln_b=0.1 * jax.random.normal(ks[5], (1, P), jnp.float32),
        w2=jax.random.normal(ks[6], (C, P), jnp.float32) * 0.5,       # conv2 weight
        b2=0.1 * jax.random.normal(ks[7], (1, C), jnp.float32),
    )

    def check(x, out, label):
        ref = reference(x, params)
        assert out.shape == x.shape
        if not jnp.allclose(out, ref, atol=1e-4, rtol=1e-4):
            raise AssertionError(f"Pallas kernel mismatch vs reference ({label})")

    # Test A: N multiple of the tile; small tn exercises the multi-tile
    # online-softmax accumulation path (no ragged tile).
    xA = jax.random.normal(ks[0], (B, C, 4, 8, 8), jnp.float32)       # N = 256
    outA = context_block(xA, params, tn=128)                          # 2 full tiles
    jax.block_until_ready(outA)
    check(xA, outA, "multi-tile")

    # Test B: multi-tile with a ragged final tile (N=315, tn=128 -> 3 tiles, rem=59),
    # exercising the last-tile zeroing + -inf masking path.
    xB = jax.random.normal(ks[8], (B, C, 5, 7, 9), jnp.float32)       # N = 315
    outB = context_block(xB, params, tn=128)
    jax.block_until_ready(outB)
    check(xB, outB, "ragged last tile")

    # Test C: default (auto-sized) tiling path — single partial tile (tn=384 > N).
    outC = context_block(xB, params)
    jax.block_until_ready(outC)
    check(xB, outC, "auto tile")

    print("KERNEL_OK")
</pallas_src>

<mosaic_0001>
module attributes {stable_mosaic.version = 11 : i64} {
  func.func @_reduce_kernel(%arg0: i32, %arg1: i32, %arg2: memref<1x8x128xf32, #tpu.memory_space<vmem>>, %arg3: memref<1x8xf32, #tpu.memory_space<vmem>>, %arg4: memref<1xf32, #tpu.memory_space<smem>>, %arg5: memref<8x2xf32, #tpu.memory_space<vmem>>, %arg6: memref<1x2xf32, #tpu.memory_space<vmem>>, %arg7: memref<1x2xf32, #tpu.memory_space<vmem>>, %arg8: memref<1x2xf32, #tpu.memory_space<vmem>>, %arg9: memref<8x2xf32, #tpu.memory_space<vmem>>, %arg10: memref<1x8xf32, #tpu.memory_space<vmem>>, %arg11: memref<1x1x8xf32, #tpu.memory_space<vmem>>, %arg12: memref<1x1xf32, #tpu.memory_space<vmem>>, %arg13: memref<1x1xf32, #tpu.memory_space<vmem>>, %arg14: memref<1x8xf32, #tpu.memory_space<vmem>>) attributes {dimension_semantics = [#tpu.dimension_semantics<parallel>, #tpu.dimension_semantics<arbitrary>], iteration_bounds = array<i64: 2, 2>, scalar_prefetch = 0 : i64, scratch_operands = 3 : i64, tpu.core_type = #tpu.core_type<tc>, window_params = [{transform_indices = @transform_0, window_bounds = array<i64: 1, 8, 128>}, {pipeline_mode = #tpu.pipeline_mode<synchronous>, transform_indices = @transform_1, window_bounds = array<i64: 1, 8>}, {transform_indices = @transform_2, window_bounds = array<i64: 1>}, {pipeline_mode = #tpu.pipeline_mode<synchronous>, transform_indices = @transform_3, window_bounds = array<i64: 8, 2>}, {pipeline_mode = #tpu.pipeline_mode<synchronous>, transform_indices = @transform_4, window_bounds = array<i64: 1, 2>}, {pipeline_mode = #tpu.pipeline_mode<synchronous>, transform_indices = @transform_5, window_bounds = array<i64: 1, 2>}, {pipeline_mode = #tpu.pipeline_mode<synchronous>, transform_indices = @transform_6, window_bounds = array<i64: 1, 2>}, {pipeline_mode = #tpu.pipeline_mode<synchronous>, transform_indices = @transform_7, window_bounds = array<i64: 8, 2>}, {pipeline_mode = #tpu.pipeline_mode<synchronous>, transform_indices = @transform_8, window_bounds = array<i64: 1, 8>}, {transform_indices = @transform_9, window_bounds = array<i64: 1, 1, 8>}]} {
    %c0_i32 = arith.constant 0 : i32
    %0 = arith.cmpi eq, %arg1, %c0_i32 : i32
    %1 = arith.extui %0 : i1 to i32
    %c0_i32_0 = arith.constant 0 : i32
    %2 = arith.cmpi ne, %1, %c0_i32_0 : i32
    scf.if %2 {
      %cst_22 = arith.constant 0xFF800000 : f32
      %35 = vector.broadcast %cst_22 : f32 to vector<1x1xf32>
      %c0_23 = arith.constant 0 : index
      %c0_24 = arith.constant 0 : index
      %36 = vector.load %arg12[%c0_23, %c0_24] : memref<1x1xf32, #tpu.memory_space<vmem>>, vector<1x1xf32>
      tpu.vector_store %arg12[%c0_23, %c0_24], %35 {strides = array<i32>} : memref<1x1xf32, #tpu.memory_space<vmem>>, vector<1x1xf32>,
      %cst_25 = arith.constant 0.000000e+00 : f32
      %37 = vector.broadcast %cst_25 : f32 to vector<1x1xf32>
      %c0_26 = arith.constant 0 : index
      %c0_27 = arith.constant 0 : index
      %38 = vector.load %arg13[%c0_26, %c0_27] : memref<1x1xf32, #tpu.memory_space<vmem>>, vector<1x1xf32>
      tpu.vector_store %arg13[%c0_26, %c0_27], %37 {strides = array<i32>} : memref<1x1xf32, #tpu.memory_space<vmem>>, vector<1x1xf32>,
      %cst_28 = arith.constant 0.000000e+00 : f32
      %39 = vector.broadcast %cst_28 : f32 to vector<1x8xf32>
      %c0_29 = arith.constant 0 : index
      %c0_30 = arith.constant 0 : index
      %40 = vector.load %arg14[%c0_29, %c0_30] : memref<1x8xf32, #tpu.memory_space<vmem>>, vector<1x8xf32>
      tpu.vector_store %arg14[%c0_29, %c0_30], %39 {strides = array<i32>} : memref<1x8xf32, #tpu.memory_space<vmem>>, vector<1x8xf32>,
    } else {
    }
    %c0 = arith.constant 0 : index
    %c0_1 = arith.constant 0 : index
    %c0_2 = arith.constant 0 : index
    %3 = vector.load %arg2[%c0, %c0_1, %c0_2] : memref<1x8x128xf32, #tpu.memory_space<vmem>>, vector<1x8x128xf32>
    %4 = vector.shape_cast %3 : vector<1x8x128xf32> to vector<8x128xf32>
    %c0_3 = arith.constant 0 : index
    %c0_4 = arith.constant 0 : index
    %5 = vector.load %arg3[%c0_3, %c0_4] : memref<1x8xf32, #tpu.memory_space<vmem>>, vector<1x8xf32>
    %cst = arith.constant dense<0.000000e+00> : vector<1x128xf32>
    %6 = tpu.matmul %5, %4, %cst {dimension_numbers = #tpu.dot_dimension_numbers<[1], [0], [0], [1], [0, 0, 1, 1], [], []>} : vector<1x8xf32>, vector<8x128xf32>, vector<1x128xf32> -> vector<1x128xf32>
    %c0_5 = arith.constant 0 : index
    %7 = memref.load %arg4[%c0_5] : memref<1xf32, #tpu.memory_space<smem>>
    %8 = vector.broadcast %7 : f32 to vector<1x128xf32>
    %9 = arith.addf %6, %8 : vector<1x128xf32>
    %c0_6 = arith.constant 0 : index
    %c0_7 = arith.constant 0 : index
    %10 = vector.load %arg12[%c0_6, %c0_7] : memref<1x1xf32, #tpu.memory_space<vmem>>, vector<1x1xf32>
    %cst_8 = arith.constant dense<0xFF800000> : vector<1xf32>
    %11 = vector.multi_reduction <maximumf>, %9, %cst_8 [1] : vector<1x128xf32> to vector<1xf32>
    %12 = vector.shape_cast %11 : vector<1xf32> to vector<1x1xf32>
    %13 = arith.maximumf %10, %12 : vector<1x1xf32>
    %14 = arith.subf %10, %13 : vector<1x1xf32>
    %15 = math.exp %14 : vector<1x1xf32>
    %16 = vector.broadcast %13 : vector<1x1xf32> to vector<1x128xf32>
    %17 = arith.subf %9, %16 : vector<1x128xf32>
    %18 = math.exp %17 : vector<1x128xf32>
    %c0_9 = arith.constant 0 : index
    %c0_10 = arith.constant 0 : index
    %19 = vector.load %arg13[%c0_9, %c0_10] : memref<1x1xf32, #tpu.memory_space<vmem>>, vector<1x1xf32>
    %20 = arith.mulf %15, %19 : vector<1x1xf32>
    %cst_11 = arith.constant dense<0.000000e+00> : vector<1xf32>
    %21 = vector.multi_reduction <add>, %18, %cst_11 [1] : vector<1x128xf32> to vector<1xf32>
    %22 = vector.shape_cast %21 : vector<1xf32> to vector<1x1xf32>
    %23 = arith.addf %20, %22 : vector<1x1xf32>
    %c0_12 = arith.constant 0 : index
    %c0_13 = arith.constant 0 : index
    %24 = vector.load %arg13[%c0_12, %c0_13] : memref<1x1xf32, #tpu.memory_space<vmem>>, vector<1x1xf32>
    tpu.vector_store %arg13[%c0_12, %c0_13], %23 {strides = array<i32>} : memref<1x1xf32, #tpu.memory_space<vmem>>, vector<1x1xf32>,
    %cst_14 = arith.constant dense<0.000000e+00> : vector<1x8xf32>
    %25 = tpu.matmul %18, %4, %cst_14 {dimension_numbers = #tpu.dot_dimension_numbers<[1], [1], [0], [0], [0, 0, 1, 0], [], []>} : vector<1x128xf32>, vector<8x128xf32>, vector<1x8xf32> -> vector<1x8xf32>
    %c0_15 = arith.constant 0 : index
    %c0_16 = arith.constant 0 : index
    %26 = vector.load %arg14[%c0_15, %c0_16] : memref<1x8xf32, #tpu.memory_space<vmem>>, vector<1x8xf32>
    %27 = vector.broadcast %15 : vector<1x1xf32> to vector<1x8xf32>
    %28 = arith.mulf %27, %26 : vector<1x8xf32>
    %29 = arith.addf %28, %25 : vector<1x8xf32>
    %c0_17 = arith.constant 0 : index
    %c0_18 = arith.constant 0 : index
    %30 = vector.load %arg14[%c0_17, %c0_18] : memref<1x8xf32, #tpu.memory_space<vmem>>, vector<1x8xf32>
    tpu.vector_store %arg14[%c0_17, %c0_18], %29 {strides = array<i32>} : memref<1x8xf32, #tpu.memory_space<vmem>>, vector<1x8xf32>,
    %c0_19 = arith.constant 0 : index
    %c0_20 = arith.constant 0 : index
    %31 = vector.load %arg12[%c0_19, %c0_20] : memref<1x1xf32, #tpu.memory_space<vmem>>, vector<1x1xf32>
    tpu.vector_store %arg12[%c0_19, %c0_20], %13 {strides = array<i32>} : memref<1x1xf32, #tpu.memory_space<vmem>>, vector<1x1xf32>,
    %c1_i32 = arith.constant 1 : i32
    %32 = arith.cmpi eq, %arg1, %c1_i32 : i32
    %33 = arith.extui %32 : i1 to i32
    %c0_i32_21 = arith.constant 0 : i32
    %34 = arith.cmpi ne, %33, %c0_i32_21 : i32
    scf.if %34 {
      %c0_22 = arith.constant 0 : index
      %c0_23 = arith.constant 0 : index
      %35 = vector.load %arg14[%c0_22, %c0_23] : memref<1x8xf32, #tpu.memory_space<vmem>>, vector<1x8xf32>
      %c0_24 = arith.constant 0 : index
      %c0_25 = arith.constant 0 : index
      %36 = vector.load %arg13[%c0_24, %c0_25] : memref<1x1xf32, #tpu.memory_space<vmem>>, vector<1x1xf32>
      %37 = tpu.reciprocal %36 : vector<1x1xf32> -> vector<1x1xf32>
      %38 = vector.broadcast %37 : vector<1x1xf32> to vector<1x8xf32>
      %39 = arith.mulf %35, %38 : vector<1x8xf32>
      %c0_26 = arith.constant 0 : index
      %c0_27 = arith.constant 0 : index
      %40 = vector.load %arg5[%c0_26, %c0_27] : memref<8x2xf32, #tpu.memory_space<vmem>>, vector<8x2xf32>
      %cst_28 = arith.constant dense<0.000000e+00> : vector<1x2xf32>
      %41 = tpu.matmul %39, %40, %cst_28 {dimension_numbers = #tpu.dot_dimension_numbers<[1], [0], [0], [1], [0, 0, 1, 1], [], []>} : vector<1x8xf32>, vector<8x2xf32>, vector<1x2xf32> -> vector<1x2xf32>
      %c0_29 = arith.constant 0 : index
      %c0_30 = arith.constant 0 : index
      %42 = vector.load %arg6[%c0_29, %c0_30] : memref<1x2xf32, #tpu.memory_space<vmem>>, vector<1x2xf32>
      %43 = arith.addf %41, %42 : vector<1x2xf32>
      %cst_31 = arith.constant dense<0.000000e+00> : vector<1xf32>
      %44 = vector.multi_reduction <add>, %43, %cst_31 [1] : vector<1x2xf32> to vector<1xf32>
      %45 = vector.shape_cast %44 : vector<1xf32> to vector<1x1xf32>
      %cst_32 = arith.constant 2.000000e+00 : f32
      %46 = vector.broadcast %cst_32 : f32 to vector<1x1xf32>
      %47 = arith.divf %45, %46 : vector<1x1xf32>
      %48 = vector.broadcast %47 : vector<1x1xf32> to vector<1x2xf32>
      %49 = arith.subf %43, %48 : vector<1x2xf32>
      %50 = arith.mulf %49, %49 : vector<1x2xf32>
      %cst_33 = arith.constant dense<0.000000e+00> : vector<1xf32>
      %51 = vector.multi_reduction <add>, %50, %cst_33 [1] : vector<1x2xf32> to vector<1xf32>
      %52 = vector.shape_cast %51 : vector<1xf32> to vector<1x1xf32>
      %cst_34 = arith.constant 2.000000e+00 : f32
      %53 = vector.broadcast %cst_34 : f32 to vector<1x1xf32>
      %54 = arith.divf %52, %53 : vector<1x1xf32>
      %55 = vector.broadcast %47 : vector<1x1xf32> to vector<1x2xf32>
      %56 = arith.subf %43, %55 : vector<1x2xf32>
      %cst_35 = arith.constant 9.99999974E-6 : f32
      %57 = vector.broadcast %cst_35 : f32 to vector<1x1xf32>
      %58 = arith.addf %54, %57 : vector<1x1xf32>
      %59 = math.rsqrt %58 : vector<1x1xf32>
      %60 = vector.broadcast %59 : vector<1x1xf32> to vector<1x2xf32>
      %61 = arith.mulf %56, %60 : vector<1x2xf32>
      %c0_36 = arith.constant 0 : index
      %c0_37 = arith.constant 0 : index
      %62 = vector.load %arg7[%c0_36, %c0_37] : memref<1x2xf32, #tpu.memory_space<vmem>>, vector<1x2xf32>
      %63 = arith.mulf %61, %62 : vector<1x2xf32>
      %c0_38 = arith.constant 0 : index
      %c0_39 = arith.constant 0 : index
      %64 = vector.load %arg8[%c0_38, %c0_39] : memref<1x2xf32, #tpu.memory_space<vmem>>, vector<1x2xf32>
      %65 = arith.addf %63, %64 : vector<1x2xf32>
      %cst_40 = arith.constant 0.000000e+00 : f32
      %66 = vector.broadcast %cst_40 : f32 to vector<1x2xf32>
      %67 = arith.maximumf %65, %66 : vector<1x2xf32>
      %c0_41 = arith.constant 0 : index
      %c0_42 = arith.constant 0 : index
      %68 = vector.load %arg9[%c0_41, %c0_42] : memref<8x2xf32, #tpu.memory_space<vmem>>, vector<8x2xf32>
      %cst_43 = arith.constant dense<0.000000e+00> : vector<1x8xf32>
      %69 = tpu.matmul %67, %68, %cst_43 {dimension_numbers = #tpu.dot_dimension_numbers<[1], [1], [0], [0], [0, 0, 1, 0], [], []>} : vector<1x2xf32>, vector<8x2xf32>, vector<1x8xf32> -> vector<1x8xf32>
      %c0_44 = arith.constant 0 : index
      %c0_45 = arith.constant 0 : index
      %70 = vector.load %arg10[%c0_44, %c0_45] : memref<1x8xf32, #tpu.memory_space<vmem>>, vector<1x8xf32>
      %71 = arith.addf %69, %70 : vector<1x8xf32>
      %72 = arith.negf %71 : vector<1x8xf32>
      %73 = math.exp %72 : vector<1x8xf32>
      %cst_46 = arith.constant 1.000000e+00 : f32
      %74 = vector.broadcast %cst_46 : f32 to vector<1x8xf32>
      %75 = arith.addf %74, %73 : vector<1x8xf32>
      %76 = arith.divf %74, %75 : vector<1x8xf32>
      %cst_47 = arith.constant 1.000000e+00 : f32
      %77 = vector.broadcast %cst_47 : f32 to vector<1x8xf32>
      %78 = arith.addf %77, %76 : vector<1x8xf32>
      %c0_48 = arith.constant 0 : index
      %c0_49 = arith.constant 0 : index
      %c0_50 = arith.constant 0 : index
      %79 = vector.load %arg11[%c0_48, %c0_49, %c0_50] : memref<1x1x8xf32, #tpu.memory_space<vmem>>, vector<1x1x8xf32>
      %80 = vector.shape_cast %79 : vector<1x1x8xf32> to vector<1x8xf32>
      %81 = vector.shape_cast %78 : vector<1x8xf32> to vector<1x1x8xf32>
      tpu.vector_store %arg11[%c0_48, %c0_49, %c0_50], %81 {strides = array<i32>} : memref<1x1x8xf32, #tpu.memory_space<vmem>>, vector<1x1x8xf32>,
    } else {
    }
    return
  }
  func.func @transform_0(%arg0: i32, %arg1: i32) -> (i32, i32, i32) {
    %c0_i32 = arith.constant 0 : i32
    %c0_i32_0 = arith.constant 0 : i32
    return %arg0, %c0_i32, %arg1 : i32, i32, i32
  }
  func.func @transform_1(%arg0: i32, %arg1: i32) -> (i32, i32) {
    %c0_i32 = arith.constant 0 : i32
    %c0_i32_0 = arith.constant 0 : i32
    %c0_i32_1 = arith.constant 0 : i32
    return %c0_i32, %c0_i32_0 : i32, i32
  }
  func.func @transform_2(%arg0: i32, %arg1: i32) -> i32 {
    %c0_i32 = arith.constant 0 : i32
    %c0_i32_0 = arith.constant 0 : i32
    return %c0_i32 : i32
  }
  func.func @transform_3(%arg0: i32, %arg1: i32) -> (i32, i32) {
    %c0_i32 = arith.constant 0 : i32
    %c0_i32_0 = arith.constant 0 : i32
    %c0_i32_1 = arith.constant 0 : i32
    return %c0_i32, %c0_i32_0 : i32, i32
  }
  func.func @transform_4(%arg0: i32, %arg1: i32) -> (i32, i32) {
    %c0_i32 = arith.constant 0 : i32
    %c0_i32_0 = arith.constant 0 : i32
    %c0_i32_1 = arith.constant 0 : i32
    return %c0_i32, %c0_i32_0 : i32, i32
  }
  func.func @transform_5(%arg0: i32, %arg1: i32) -> (i32, i32) {
    %c0_i32 = arith.constant 0 : i32
    %c0_i32_0 = arith.constant 0 : i32
    %c0_i32_1 = arith.constant 0 : i32
    return %c0_i32, %c0_i32_0 : i32, i32
  }
  func.func @transform_6(%arg0: i32, %arg1: i32) -> (i32, i32) {
    %c0_i32 = arith.constant 0 : i32
    %c0_i32_0 = arith.constant 0 : i32
    %c0_i32_1 = arith.constant 0 : i32
    return %c0_i32, %c0_i32_0 : i32, i32
  }
  func.func @transform_7(%arg0: i32, %arg1: i32) -> (i32, i32) {
    %c0_i32 = arith.constant 0 : i32
    %c0_i32_0 = arith.constant 0 : i32
    %c0_i32_1 = arith.constant 0 : i32
    return %c0_i32, %c0_i32_0 : i32, i32
  }
  func.func @transform_8(%arg0: i32, %arg1: i32) -> (i32, i32) {
    %c0_i32 = arith.constant 0 : i32
    %c0_i32_0 = arith.constant 0 : i32
    %c0_i32_1 = arith.constant 0 : i32
    return %c0_i32, %c0_i32_0 : i32, i32
  }
  func.func @transform_9(%arg0: i32, %arg1: i32) -> (i32, i32, i32) {
    %c0_i32 = arith.constant 0 : i32
    %c0_i32_0 = arith.constant 0 : i32
    %c0_i32_1 = arith.constant 0 : i32
    return %arg0, %c0_i32, %c0_i32_0 : i32, i32, i32
  }
}

module attributes {stable_mosaic.version = 11 : i64} {
  func.func @_apply_kernel(%arg0: i32, %arg1: i32, %arg2: memref<1x8x128xf32, #tpu.memory_space<vmem>>, %arg3: memref<1x8x1xf32, #tpu.memory_space<vmem>>, %arg4: memref<1x8x128xf32, #tpu.memory_space<vmem>>) attributes {dimension_semantics = [#tpu.dimension_semantics<parallel>, #tpu.dimension_semantics<parallel>], iteration_bounds = array<i64: 2, 2>, scalar_prefetch = 0 : i64, scratch_operands = 0 : i64, tpu.core_type = #tpu.core_type<tc>, window_params = [{transform_indices = @transform_0, window_bounds = array<i64: 1, 8, 128>}, {transform_indices = @transform_1, window_bounds = array<i64: 1, 8, 1>}, {transform_indices = @transform_2, window_bounds = array<i64: 1, 8, 128>}]} {
    %c0 = arith.constant 0 : index
    %c0_0 = arith.constant 0 : index
    %c0_1 = arith.constant 0 : index
    %0 = vector.load %arg2[%c0, %c0_0, %c0_1] : memref<1x8x128xf32, #tpu.memory_space<vmem>>, vector<1x8x128xf32>
    %c0_2 = arith.constant 0 : index
    %c0_3 = arith.constant 0 : index
    %c0_4 = arith.constant 0 : index
    %1 = vector.load %arg3[%c0_2, %c0_3, %c0_4] : memref<1x8x1xf32, #tpu.memory_space<vmem>>, vector<1x8x1xf32>
    %2 = vector.broadcast %1 : vector<1x8x1xf32> to vector<1x8x128xf32>
    %3 = arith.mulf %0, %2 : vector<1x8x128xf32>
    %c0_5 = arith.constant 0 : index
    %c0_6 = arith.constant 0 : index
    %c0_7 = arith.constant 0 : index
    %4 = vector.load %arg4[%c0_5, %c0_6, %c0_7] : memref<1x8x128xf32, #tpu.memory_space<vmem>>, vector<1x8x128xf32>
    tpu.vector_store %arg4[%c0_5, %c0_6, %c0_7], %3 {strides = array<i32>} : memref<1x8x128xf32, #tpu.memory_space<vmem>>, vector<1x8x128xf32>,
    return
  }
  func.func @transform_0(%arg0: i32, %arg1: i32) -> (i32, i32, i32) {
    %c0_i32 = arith.constant 0 : i32
    %c0_i32_0 = arith.constant 0 : i32
    return %arg0, %c0_i32, %arg1 : i32, i32, i32
  }
  func.func @transform_1(%arg0: i32, %arg1: i32) -> (i32, i32, i32) {
    %c0_i32 = arith.constant 0 : i32
    %c0_i32_0 = arith.constant 0 : i32
    %c0_i32_1 = arith.constant 0 : i32
    return %arg0, %c0_i32, %c0_i32_0 : i32, i32, i32
  }
  func.func @transform_2(%arg0: i32, %arg1: i32) -> (i32, i32, i32) {
    %c0_i32 = arith.constant 0 : i32
    %c0_i32_0 = arith.constant 0 : i32
    return %arg0, %c0_i32, %arg1 : i32, i32, i32
  }
}

</mosaic_0001>

<llo_original>
// kernel: context_block.3
$region0: #{context_block.3}
  #allocation0 [shape = 'u32[]', space=smem, size = 0x4, offset = 0x4, fixed_abs, tag = 'smem constant byte address 0x4 - core index']
  #allocation1 [shape = 'u32[144,128]{1,0:T(1,128)}', space=vmem, size = 0x12000, scoped, tag = 'internal scratch']
  %s0 = inlined_call_operand.vmem [shape: f32[2,8,256], index: 0, kind: input, shape index: {}]
  %s1 = inlined_call_operand.vmem [shape: f32[2,8,1], index: 1, kind: input, shape index: {}]
  %s2 = inlined_call_operand.vmem [shape: f32[2,8,256], index: 2, kind: output, shape index: {}]
  %s3 = sld [smem:[#allocation0]]
  $region41: #{context_block.3} parent=0
    _
  %s5 = ssub.s32 1, %s3
  %s6 = scalar_select 0, %s5, %s3
  loop: start=0, step=1, limit=6
  $region2: #{context_block.3} parent=0 // loop_pre_header
    _
  $region3: #{context_block.3} parent=0 // loop_header
    %s8 = sphi 0, %s12
    %p9 = scmp.ge.s32.totalorder %s8, 6
    %s15 = sphi 0, %s27
    %s16 = sphi 0, %s23
    %s17 = sphi 0, %s15
    %s18 = sphi 0, %s16
    %s19 = sphi 0, %s17
    %s20 = sphi 0, %s18
    %s32 = sphi 0, %s34
    %s35 = sphi 0, %s32
    %s36 = sphi 0, %s35
    %s52 = sphi 0, %s36
    %s58 = sphi 0, %s60
    %s61 = sphi 0, %s58
    %s62 = sphi 0, %s61
    %s78 = sphi 0, %s62
    %s86 = sphi 0, %s88
    %s89 = sphi 0, %s86
    %s90 = sphi 0, %s89
    %s106 = sphi 0, %s90
  $region4: #{context_block.3} parent=0 // loop_header_branch
    %11 = sbr.rel (%p9) target = $region8
  $region5: #{context_block.3} parent=0 // loop_body
    %s13 = ssub.s32 %s8, 1
    %s14 = ssub.s32 %s8, 2
    %s21 = sadd.s32 1, %s16
    %p22 = scmp.ge.s32.totalorder %s21, 2
    %s23 = scalar_select %p22, 0, %s21
    %s24 = sadd.s32 1, %s15
    %s25 = scalar_select %p22, %s24, %s15
    %p26 = scmp.ge.s32.totalorder %s25, 2
    %s27 = scalar_select %p26, 0, %s25
    %s28 = ssub.s32 %s15, %s27
    %s29 = ssub.s32 %s16, %s23
    %s30 = sor.u32 %s28, %s29
    %p31 = scmp.eq.s32.totalorder %s30, 0
    %s33 = sadd.s32 %s32, 1
    %s34 = scalar_select %p31, %s32, %s33
    %p37 = pneg %p31
    %p38 = scmp.eq.s32.totalorder %s8, 3
    %p39 = por %p37, %p38
    %p40 = scmp.ne.s32.totalorder %s32, %s35
    %p41 = scmp.eq.s32.totalorder %s8, 0
    %p42 = por %p40, %p41
    %p43 = scmp.ne.s32.totalorder %s32, %s35
    %p44 = scmp.eq.s32.totalorder %s13, 3
    %p45 = por %p43, %p44
    %p46 = scmp.ne.s32.totalorder %s35, %s36
    %p47 = scmp.eq.s32.totalorder %s13, 0
    %p48 = por %p46, %p47
    %p49 = scmp.ne.s32.totalorder %s35, %s36
    %p50 = scmp.eq.s32.totalorder %s14, 3
    %p51 = por %p49, %p50
    %p53 = scmp.ne.s32.totalorder %s36, %s52
    %p54 = scmp.eq.s32.totalorder %s14, 0
    %p55 = por %p53, %p54
    %s56 = ssub.s32 %s15, %s27
    %p57 = scmp.eq.s32.totalorder %s56, 0
    %s59 = sadd.s32 %s58, 1
    %s60 = scalar_select %p57, %s58, %s59
    %p63 = pneg %p57
    %p64 = scmp.eq.s32.totalorder %s8, 3
    %p65 = por %p63, %p64
    %p66 = scmp.ne.s32.totalorder %s58, %s61
    %p67 = scmp.eq.s32.totalorder %s8, 0
    %p68 = por %p66, %p67
    %p69 = scmp.ne.s32.totalorder %s58, %s61
    %p70 = scmp.eq.s32.totalorder %s13, 3
    %p71 = por %p69, %p70
    %p72 = scmp.ne.s32.totalorder %s61, %s62
    %p73 = scmp.eq.s32.totalorder %s13, 0
    %p74 = por %p72, %p73
    %p75 = scmp.ne.s32.totalorder %s61, %s62
    %p76 = scmp.eq.s32.totalorder %s14, 3
    %p77 = por %p75, %p76
    %p79 = scmp.ne.s32.totalorder %s62, %s78
    %p80 = scmp.eq.s32.totalorder %s14, 0
    %p81 = por %p79, %p80
    %s82 = ssub.s32 %s15, %s27
    %s83 = ssub.s32 %s16, %s23
    %s84 = sor.u32 %s82, %s83
    %p85 = scmp.eq.s32.totalorder %s84, 0
    %s87 = sadd.s32 %s86, 1
    %s88 = scalar_select %p85, %s86, %s87
    %p91 = pneg %p85
    %p92 = scmp.eq.s32.totalorder %s8, 3
    %p93 = por %p91, %p92
    %p94 = scmp.ne.s32.totalorder %s86, %s89
    %p95 = scmp.eq.s32.totalorder %s8, 0
    %p96 = por %p94, %p95
    %p97 = scmp.ne.s32.totalorder %s86, %s89
    %p98 = scmp.eq.s32.totalorder %s13, 3
    %p99 = por %p97, %p98
    %p100 = scmp.ne.s32.totalorder %s89, %s90
    %p101 = scmp.eq.s32.totalorder %s13, 0
    %p102 = por %p100, %p101
    %p103 = scmp.ne.s32.totalorder %s89, %s90
    %p104 = scmp.eq.s32.totalorder %s14, 3
    %p105 = por %p103, %p104
    %p107 = scmp.ne.s32.totalorder %s90, %s106
    %p108 = scmp.eq.s32.totalorder %s14, 0
    %p109 = por %p107, %p108
    %p110 = scmp.le.s32.totalorder 1, %s8
    %p111 = scmp.lt.s32.totalorder %s8, 5
    %p112 = pnand %p110, %p111
    %p113 = pneg %p112
    // Predicated region
    $region9: #{context_block.3} parent=5 // pred_check
      _
    $region10: #{context_block.3} parent=5 // pred_check_branch
      %115 = sbr.rel (%p112) target = $region12
    $region11: #{context_block.3} parent=5 // pred_region
      %s116 = ssub.s32 %s8, 1
    $region12: #{context_block.3} parent=5 // pred_fallthru
      _
    %p117 = scmp.lt.s32.totalorder %s8, 4
    // Predicated region
    $region13: #{context_block.3} parent=5 // pred_check
      %p118 = pneg %p117
    $region14: #{context_block.3} parent=5 // pred_check_branch
      %120 = sbr.rel (%p118) target = $region16
    $region15: #{context_block.3} parent=5 // pred_region
      // Predicated region
      $region17: #{context_block.3} parent=15 // pred_check
        %p121 = pneg %p42
      $region18: #{context_block.3} parent=15 // pred_check_branch
        %123 = sbr.rel (%p121) target = $region20
      $region19: #{context_block.3} parent=15 // pred_region
        %p124 = scmp.lt.s32.totalorder %s15, 1
        %s125 = scalar_select %p124, %s15, 1
        %p126 = scmp.lt.s32.totalorder %s16, 1
        %s127 = scalar_select %p126, %s16, 1
        %s128 = smul.addr %s125, 2
        %s129 = sadd.s32 %s127, %s128
        %s130 = smul.addr %s129, 8
        %s131 = scalar_lea.vmem %s0, %s130
      $region20: #{context_block.3} parent=15 // pred_fallthru
        _
      // Predicated region
      $region21: #{context_block.3} parent=15 // pred_check
        %p132 = pneg %p68
      $region22: #{context_block.3} parent=15 // pred_check_branch
        %134 = sbr.rel (%p132) target = $region24
      $region23: #{context_block.3} parent=15 // pred_region
        %p135 = scmp.lt.s32.totalorder %s15, 1
        %s136 = scalar_select %p135, %s15, 1
        %s137 = smul.addr %s136, 8
        %s138 = scalar_lea.vmem %s1, %s137
      $region24: #{context_block.3} parent=15 // pred_fallthru
        _
    $region16: #{context_block.3} parent=5 // pred_fallthru
      _
    %p139 = scmp.le.s32.totalorder 1, %s8
    %p140 = scmp.lt.s32.totalorder %s8, 5
    %p141 = pnand %p139, %p140
    %p142 = pneg %p141
    // Predicated region
    $region25: #{context_block.3} parent=5 // pred_check
      _
    $region26: #{context_block.3} parent=5 // pred_check_branch
      %144 = sbr.rel (%p141) target = $region28
    $region27: #{context_block.3} parent=5 // pred_region
      %s145 = ssub.s32 %s8, 1
      %p146 = scmp.lt.s32.totalorder %s17, 1
      %s147 = scalar_select %p146, %s17, 1
      %p148 = scmp.lt.s32.totalorder %s18, 1
      %s149 = scalar_select %p148, %s18, 1
      %s150 = smul.addr %s147, 2
      %s151 = sadd.s32 %s149, %s150
      %s152 = smul.addr %s151, 8
      %s153 = scalar_lea.vmem %s0, %s152
      %p154 = pneg %p48
      %p155 = pneg %p45
      %p156 = scmp.lt.s32.totalorder %s17, 1
      %s157 = scalar_select %p156, %s17, 1
      %s158 = smul.addr %s157, 8
      %s159 = scalar_lea.vmem %s1, %s158
      %p160 = pneg %p74
      %p161 = pneg %p71
      %p162 = pneg %p102
      %p163 = pneg %p99
      %p164 = scmp.lt.s32.totalorder %s17, 1
      %s165 = scalar_select %p164, %s17, 1
      %p166 = scmp.lt.s32.totalorder %s18, 1
      %s167 = scalar_select %p166, %s18, 1
      %s168 = smul.addr %s165, 2
      %s169 = sadd.s32 %s167, %s168
      %s170 = smul.addr %s169, 8
      %s171 = scalar_lea.vmem %s2, %s170
      %p172 = scmp.lt.s32.totalorder %s17, 1
      %s173 = scalar_select %p172, %s17, 1
      %p174 = scmp.lt.s32.totalorder %s18, 1
      %s175 = scalar_select %p174, %s18, 1
      %s176 = smul.addr %s173, 2
      %s177 = sadd.s32 %s175, %s176
      %s178 = smul.addr %s177, 8
      %s179 = scalar_lea.vmem %s0, %s178
      %p180 = scmp.lt.s32.totalorder %s17, 1
      %s181 = scalar_select %p180, %s17, 1
      %s182 = smul.addr %s181, 8
      %s183 = scalar_lea.vmem %s1, %s182
      %p184 = scmp.lt.s32.totalorder %s17, 1
      %s185 = scalar_select %p184, %s17, 1
      %p186 = scmp.lt.s32.totalorder %s18, 1
      %s187 = scalar_select %p186, %s18, 1
      %s188 = smul.addr %s185, 2
      %s189 = sadd.s32 %s187, %s188
      %s190 = smul.addr %s189, 8
      %s191 = scalar_lea.vmem %s2, %s190
      %v192 = vld [vmem:[%s179] sm:$0xff]
      %v193 = vld [vmem:[%s183] sm:$0xff]
      %195 = vset.pattern.permute.xlu0 0
      %196 = vperm.xlu0 %195, %v193
      %v197 = vpop.permute.xlu0 %196
      %v199 = vmul.f32 %v192, %v197
      %200 = vst [vmem:[%s191] sm:$0xff] %v199
      %p201 = scmp.lt.s32.totalorder %s17, 1
      %s202 = scalar_select %p201, %s17, 1
      %p203 = scmp.lt.s32.totalorder %s18, 1
      %s204 = scalar_select %p203, %s18, 1
      %s205 = smul.addr %s202, 2
      %s206 = sadd.s32 %s204, %s205
      %s207 = smul.addr %s206, 8
      %s208 = scalar_lea.vmem %s2, %s207
      // Predicated region
      $region29: #{context_block.3} parent=27 // pred_check
        %p209 = pneg %p99
      $region30: #{context_block.3} parent=27 // pred_check_branch
        %211 = sbr.rel (%p209) target = $region32
      $region31: #{context_block.3} parent=27 // pred_region
        _
      $region32: #{context_block.3} parent=27 // pred_fallthru
        _
    $region28: #{context_block.3} parent=5 // pred_fallthru
      _
    %p212 = scmp.le.s32.totalorder 2, %s8
    // Predicated region
    $region33: #{context_block.3} parent=5 // pred_check
      %p213 = pneg %p212
    $region34: #{context_block.3} parent=5 // pred_check_branch
      %215 = sbr.rel (%p213) target = $region36
    $region35: #{context_block.3} parent=5 // pred_region
      %s216 = ssub.s32 %s8, 2
      // Predicated region
      $region37: #{context_block.3} parent=35 // pred_check
        %p217 = pneg %p105
      $region38: #{context_block.3} parent=35 // pred_check_branch
        %219 = sbr.rel (%p217) target = $region40
      $region39: #{context_block.3} parent=35 // pred_region
        %p220 = scmp.lt.s32.totalorder %s19, 1
        %s221 = scalar_select %p220, %s19, 1
        %p222 = scmp.lt.s32.totalorder %s20, 1
        %s223 = scalar_select %p222, %s20, 1
        %s224 = smul.addr %s221, 2
        %s225 = sadd.s32 %s223, %s224
        %s226 = smul.addr %s225, 8
        %s227 = scalar_lea.vmem %s2, %s226
      $region40: #{context_block.3} parent=35 // pred_fallthru
        _
    $region36: #{context_block.3} parent=5 // pred_fallthru
      _
  $region6: #{context_block.3} parent=0 // loop_footer
    %s12 = sadd.s32 1, %s8
  $region7: #{context_block.3} parent=0 // loop_footer_branch
    %7 = sbr.rel target = $region3
  $region8: #{context_block.3} parent=0 // loop_exit
    _

// kernel: context_block.2
$region0: #{context_block.2}
  #allocation0 [shape = 'u32[]', space=smem, size = 0x4, offset = 0x4, fixed_abs, tag = 'smem constant byte address 0x4 - core index']
  #allocation1 [shape = 'u32[144,128]{1,0:T(1,128)}', space=vmem, size = 0x12000, scoped, tag = 'internal scratch']
  #allocation2 [shape = 'f32[1,1]{1,0:T(1,128)}', space=vmem, size = 0x200, scoped, tag = 'scratch operand']
  #allocation3 [shape = 'f32[1,1]{1,0:T(1,128)}', space=vmem, size = 0x200, scoped, tag = 'scratch operand']
  #allocation4 [shape = 'f32[1,8]{1,0:T(1,128)}', space=vmem, size = 0x200, scoped, tag = 'scratch operand']
  #allocation5 [shape = 'f32[1]{0:T(128)S(6)}', space=smem, size = 0x200, scoped, tag = 'scoped memory for context_block.2']
  %s0 = inlined_call_operand.vmem [shape: f32[2,8,256], index: 0, kind: input, shape index: {}]
  %s1 = inlined_call_operand.vmem [shape: f32[1,8], index: 1, kind: input, shape index: {}]
  %s2 = inlined_call_operand.<no memory space> [shape: f32[1], index: 2, kind: input, shape index: {}]
  %s3 = inlined_call_operand.vmem [shape: f32[8,2], index: 3, kind: input, shape index: {}]
  %s4 = inlined_call_operand.vmem [shape: f32[1,2], index: 4, kind: input, shape index: {}]
  %s5 = inlined_call_operand.vmem [shape: f32[1,2], index: 5, kind: input, shape index: {}]
  %s6 = inlined_call_operand.vmem [shape: f32[1,2], index: 6, kind: input, shape index: {}]
  %s7 = inlined_call_operand.vmem [shape: f32[8,2], index: 7, kind: input, shape index: {}]
  %s8 = inlined_call_operand.vmem [shape: f32[1,8], index: 8, kind: input, shape index: {}]
  %s9 = inlined_call_operand.vmem [shape: f32[2,1,8], index: 9, kind: output, shape index: {}]
  %s10 = sld [smem:[#allocation0]]
  $region77: #{context_block.2} parent=0
    _
  %s12 = ssub.s32 1, %s10
  %s13 = scalar_select 0, %s12, %s10
  %14 = sst [smem:[#allocation5]] %s2
  loop: start=0, step=1, limit=6
  $region2: #{context_block.2} parent=0 // loop_pre_header
    _
  $region3: #{context_block.2} parent=0 // loop_header
    %s16 = sphi 0, %s20
    %p17 = scmp.ge.s32.totalorder %s16, 6
    %s23 = sphi 0, %s35
    %s24 = sphi 0, %s31
    %s25 = sphi 0, %s23
    %s26 = sphi 0, %s24
    %s27 = sphi 0, %s25
    %s28 = sphi 0, %s26
    %s40 = sphi 0, %s42
    %s43 = sphi 0, %s40
    %s44 = sphi 0, %s43
    %s60 = sphi 0, %s44
    %s64 = sphi 0, %s64
    %s66 = sphi 0, %s64
    %s67 = sphi 0, %s66
    %s81 = sphi 0, %s67
    %s85 = sphi 0, %s85
    %s87 = sphi 0, %s85
    %s88 = sphi 0, %s87
    %s102 = sphi 0, %s88
    %s106 = sphi 0, %s106
    %s108 = sphi 0, %s106
    %s109 = sphi 0, %s108
    %s123 = sphi 0, %s109
    %s127 = sphi 0, %s127
    %s129 = sphi 0, %s127
    %s130 = sphi 0, %s129
    %s144 = sphi 0, %s130
    %s148 = sphi 0, %s148
    %s150 = sphi 0, %s148
    %s151 = sphi 0, %s150
    %s165 = sphi 0, %s151
    %s169 = sphi 0, %s169
    %s171 = sphi 0, %s169
    %s172 = sphi 0, %s171
    %s186 = sphi 0, %s172
    %s190 = sphi 0, %s190
    %s192 = sphi 0, %s190
    %s193 = sphi 0, %s192
    %s207 = sphi 0, %s193
    %s211 = sphi 0, %s211
    %s213 = sphi 0, %s211
    %s214 = sphi 0, %s213
    %s228 = sphi 0, %s214
    %s234 = sphi 0, %s236
    %s237 = sphi 0, %s234
    %s238 = sphi 0, %s237
    %s254 = sphi 0, %s238
  $region4: #{context_block.2} parent=0 // loop_header_branch
    %19 = sbr.rel (%p17) target = $region8
  $region5: #{context_block.2} parent=0 // loop_body
    %s21 = ssub.s32 %s16, 1
    %s22 = ssub.s32 %s16, 2
    %s29 = sadd.s32 1, %s24
    %p30 = scmp.ge.s32.totalorder %s29, 2
    %s31 = scalar_select %p30, 0, %s29
    %s32 = sadd.s32 1, %s23
    %s33 = scalar_select %p30, %s32, %s23
    %p34 = scmp.ge.s32.totalorder %s33, 2
    %s35 = scalar_select %p34, 0, %s33
    %s36 = ssub.s32 %s23, %s35
    %s37 = ssub.s32 %s24, %s31
    %s38 = sor.u32 %s36, %s37
    %p39 = scmp.eq.s32.totalorder %s38, 0
    %s41 = sadd.s32 %s40, 1
    %s42 = scalar_select %p39, %s40, %s41
    %p45 = pneg %p39
    %p46 = scmp.eq.s32.totalorder %s16, 3
    %p47 = por %p45, %p46
    %p48 = scmp.ne.s32.totalorder %s40, %s43
    %p49 = scmp.eq.s32.totalorder %s16, 0
    %p50 = por %p48, %p49
    %p51 = scmp.ne.s32.totalorder %s40, %s43
    %p52 = scmp.eq.s32.totalorder %s21, 3
    %p53 = por %p51, %p52
    %p54 = scmp.ne.s32.totalorder %s43, %s44
    %p55 = scmp.eq.s32.totalorder %s21, 0
    %p56 = por %p54, %p55
    %p57 = scmp.ne.s32.totalorder %s43, %s44
    %p58 = scmp.eq.s32.totalorder %s22, 3
    %p59 = por %p57, %p58
    %p61 = scmp.ne.s32.totalorder %s44, %s60
    %p62 = scmp.eq.s32.totalorder %s22, 0
    %p63 = por %p61, %p62
    %s65 = sadd.s32 %s64, 1
    %p68 = scmp.eq.s32.totalorder %s16, 3
    %p69 = scmp.ne.s32.totalorder %s64, %s66
    %p70 = scmp.eq.s32.totalorder %s16, 0
    %p71 = por %p69, %p70
    %p72 = scmp.ne.s32.totalorder %s64, %s66
    %p73 = scmp.eq.s32.totalorder %s21, 3
    %p74 = por %p72, %p73
    %p75 = scmp.ne.s32.totalorder %s66, %s67
    %p76 = scmp.eq.s32.totalorder %s21, 0
    %p77 = por %p75, %p76
    %p78 = scmp.ne.s32.totalorder %s66, %s67
    %p79 = scmp.eq.s32.totalorder %s22, 3
    %p80 = por %p78, %p79
    %p82 = scmp.ne.s32.totalorder %s67, %s81
    %p83 = scmp.eq.s32.totalorder %s22, 0
    %p84 = por %p82, %p83
    %s86 = sadd.s32 %s85, 1
    %p89 = scmp.eq.s32.totalorder %s16, 3
    %p90 = scmp.ne.s32.totalorder %s85, %s87
    %p91 = scmp.eq.s32.totalorder %s16, 0
    %p92 = por %p90, %p91
    %p93 = scmp.ne.s32.totalorder %s85, %s87
    %p94 = scmp.eq.s32.totalorder %s21, 3
    %p95 = por %p93, %p94
    %p96 = scmp.ne.s32.totalorder %s87, %s88
    %p97 = scmp.eq.s32.totalorder %s21, 0
    %p98 = por %p96, %p97
    %p99 = scmp.ne.s32.totalorder %s87, %s88
    %p100 = scmp.eq.s32.totalorder %s22, 3
    %p101 = por %p99, %p100
    %p103 = scmp.ne.s32.totalorder %s88, %s102
    %p104 = scmp.eq.s32.totalorder %s22, 0
    %p105 = por %p103, %p104
    %s107 = sadd.s32 %s106, 1
    %p110 = scmp.eq.s32.totalorder %s16, 3
    %p111 = scmp.ne.s32.totalorder %s106, %s108
    %p112 = scmp.eq.s32.totalorder %s16, 0
    %p113 = por %p111, %p112
    %p114 = scmp.ne.s32.totalorder %s106, %s108
    %p115 = scmp.eq.s32.totalorder %s21, 3
    %p116 = por %p114, %p115
    %p117 = scmp.ne.s32.totalorder %s108, %s109
    %p118 = scmp.eq.s32.totalorder %s21, 0
    %p119 = por %p117, %p118
    %p120 = scmp.ne.s32.totalorder %s108, %s109
    %p121 = scmp.eq.s32.totalorder %s22, 3
    %p122 = por %p120, %p121
    %p124 = scmp.ne.s32.totalorder %s109, %s123
    %p125 = scmp.eq.s32.totalorder %s22, 0
    %p126 = por %p124, %p125
    %s128 = sadd.s32 %s127, 1
    %p131 = scmp.eq.s32.totalorder %s16, 3
    %p132 = scmp.ne.s32.totalorder %s127, %s129
    %p133 = scmp.eq.s32.totalorder %s16, 0
    %p134 = por %p132, %p133
    %p135 = scmp.ne.s32.totalorder %s127, %s129
    %p136 = scmp.eq.s32.totalorder %s21, 3
    %p137 = por %p135, %p136
    %p138 = scmp.ne.s32.totalorder %s129, %s130
    %p139 = scmp.eq.s32.totalorder %s21, 0
    %p140 = por %p138, %p139
    %p141 = scmp.ne.s32.totalorder %s129, %s130
    %p142 = scmp.eq.s32.totalorder %s22, 3
    %p143 = por %p141, %p142
    %p145 = scmp.ne.s32.totalorder %s130, %s144
    %p146 = scmp.eq.s32.totalorder %s22, 0
    %p147 = por %p145, %p146
    %s149 = sadd.s32 %s148, 1
    %p152 = scmp.eq.s32.totalorder %s16, 3
    %p153 = scmp.ne.s32.totalorder %s148, %s150
    %p154 = scmp.eq.s32.totalorder %s16, 0
    %p155 = por %p153, %p154
    %p156 = scmp.ne.s32.totalorder %s148, %s150
    %p157 = scmp.eq.s32.totalorder %s21, 3
    %p158 = por %p156, %p157
    %p159 = scmp.ne.s32.totalorder %s150, %s151
    %p160 = scmp.eq.s32.totalorder %s21, 0
    %p161 = por %p159, %p160
    %p162 = scmp.ne.s32.totalorder %s150, %s151
    %p163 = scmp.eq.s32.totalorder %s22, 3
    %p164 = por %p162, %p163
    %p166 = scmp.ne.s32.totalorder %s151, %s165
    %p167 = scmp.eq.s32.totalorder %s22, 0
    %p168 = por %p166, %p167
    %s170 = sadd.s32 %s169, 1
    %p173 = scmp.eq.s32.totalorder %s16, 3
    %p174 = scmp.ne.s32.totalorder %s169, %s171
    %p175 = scmp.eq.s32.totalorder %s16, 0
    %p176 = por %p174, %p175
    %p177 = scmp.ne.s32.totalorder %s169, %s171
    %p178 = scmp.eq.s32.totalorder %s21, 3
    %p179 = por %p177, %p178
    %p180 = scmp.ne.s32.totalorder %s171, %s172
    %p181 = scmp.eq.s32.totalorder %s21, 0
    %p182 = por %p180, %p181
    %p183 = scmp.ne.s32.totalorder %s171, %s172
    %p184 = scmp.eq.s32.totalorder %s22, 3
    %p185 = por %p183, %p184
    %p187 = scmp.ne.s32.totalorder %s172, %s186
    %p188 = scmp.eq.s32.totalorder %s22, 0
    %p189 = por %p187, %p188
    %s191 = sadd.s32 %s190, 1
    %p194 = scmp.eq.s32.totalorder %s16, 3
    %p195 = scmp.ne.s32.totalorder %s190, %s192
    %p196 = scmp.eq.s32.totalorder %s16, 0
    %p197 = por %p195, %p196
    %p198 = scmp.ne.s32.totalorder %s190, %s192
    %p199 = scmp.eq.s32.totalorder %s21, 3
    %p200 = por %p198, %p199
    %p201 = scmp.ne.s32.totalorder %s192, %s193
    %p202 = scmp.eq.s32.totalorder %s21, 0
    %p203 = por %p201, %p202
    %p204 = scmp.ne.s32.totalorder %s192, %s193
    %p205 = scmp.eq.s32.totalorder %s22, 3
    %p206 = por %p204, %p205
    %p208 = scmp.ne.s32.totalorder %s193, %s207
    %p209 = scmp.eq.s32.totalorder %s22, 0
    %p210 = por %p208, %p209
    %s212 = sadd.s32 %s211, 1
    %p215 = scmp.eq.s32.totalorder %s16, 3
    %p216 = scmp.ne.s32.totalorder %s211, %s213
    %p217 = scmp.eq.s32.totalorder %s16, 0
    %p218 = por %p216, %p217
    %p219 = scmp.ne.s32.totalorder %s211, %s213
    %p220 = scmp.eq.s32.totalorder %s21, 3
    %p221 = por %p219, %p220
    %p222 = scmp.ne.s32.totalorder %s213, %s214
    %p223 = scmp.eq.s32.totalorder %s21, 0
    %p224 = por %p222, %p223
    %p225 = scmp.ne.s32.totalorder %s213, %s214
    %p226 = scmp.eq.s32.totalorder %s22, 3
    %p227 = por %p225, %p226
    %p229 = scmp.ne.s32.totalorder %s214, %s228
    %p230 = scmp.eq.s32.totalorder %s22, 0
    %p231 = por %p229, %p230
    %s232 = ssub.s32 %s23, %s35
    %p233 = scmp.eq.s32.totalorder %s232, 0
    %s235 = sadd.s32 %s234, 1
    %s236 = scalar_select %p233, %s234, %s235
    %p239 = pneg %p233
    %p240 = scmp.eq.s32.totalorder %s16, 3
    %p241 = por %p239, %p240
    %p242 = scmp.ne.s32.totalorder %s234, %s237
    %p243 = scmp.eq.s32.totalorder %s16, 0
    %p244 = por %p242, %p243
    %p245 = scmp.ne.s32.totalorder %s234, %s237
    %p246 = scmp.eq.s32.totalorder %s21, 3
    %p247 = por %p245, %p246
    %p248 = scmp.ne.s32.totalorder %s237, %s238
    %p249 = scmp.eq.s32.totalorder %s21, 0
    %p250 = por %p248, %p249
    %p251 = scmp.ne.s32.totalorder %s237, %s238
    %p252 = scmp.eq.s32.totalorder %s22, 3
    %p253 = por %p251, %p252
    %p255 = scmp.ne.s32.totalorder %s238, %s254
    %p256 = scmp.eq.s32.totalorder %s22, 0
    %p257 = por %p255, %p256
    %p258 = scmp.le.s32.totalorder 1, %s16
    %p259 = scmp.lt.s32.totalorder %s16, 5
    %p260 = pnand %p258, %p259
    %p261 = pneg %p260
    // Predicated region
    $region9: #{context_block.2} parent=5 // pred_check
      _
    $region10: #{context_block.2} parent=5 // pred_check_branch
      %263 = sbr.rel (%p260) target = $region12
    $region11: #{context_block.2} parent=5 // pred_region
      %s264 = ssub.s32 %s16, 1
      // Predicated region
      $region13: #{context_block.2} parent=11 // pred_check
        %p265 = pneg %p77
      $region14: #{context_block.2} parent=11 // pred_check_branch
        %267 = sbr.rel (%p265) target = $region16
      $region15: #{context_block.2} parent=11 // pred_region
        _
      $region16: #{context_block.2} parent=11 // pred_fallthru
        _
      // Predicated region
      $region17: #{context_block.2} parent=11 // pred_check
        %p268 = pneg %p98
      $region18: #{context_block.2} parent=11 // pred_check_branch
        %270 = sbr.rel (%p268) target = $region20
      $region19: #{context_block.2} parent=11 // pred_region
        _
      $region20: #{context_block.2} parent=11 // pred_fallthru
        _
      // Predicated region
      $region21: #{context_block.2} parent=11 // pred_check
        %p271 = pneg %p119
      $region22: #{context_block.2} parent=11 // pred_check_branch
        %273 = sbr.rel (%p271) target = $region24
      $region23: #{context_block.2} parent=11 // pred_region
        _
      $region24: #{context_block.2} parent=11 // pred_fallthru
        _
      // Predicated region
      $region25: #{context_block.2} parent=11 // pred_check
        %p274 = pneg %p140
      $region26: #{context_block.2} parent=11 // pred_check_branch
        %276 = sbr.rel (%p274) target = $region28
      $region27: #{context_block.2} parent=11 // pred_region
        _
      $region28: #{context_block.2} parent=11 // pred_fallthru
        _
      // Predicated region
      $region29: #{context_block.2} parent=11 // pred_check
        %p277 = pneg %p161
      $region30: #{context_block.2} parent=11 // pred_check_branch
        %279 = sbr.rel (%p277) target = $region32
      $region31: #{context_block.2} parent=11 // pred_region
        _
      $region32: #{context_block.2} parent=11 // pred_fallthru
        _
      // Predicated region
      $region33: #{context_block.2} parent=11 // pred_check
        %p280 = pneg %p182
      $region34: #{context_block.2} parent=11 // pred_check_branch
        %282 = sbr.rel (%p280) target = $region36
      $region35: #{context_block.2} parent=11 // pred_region
        _
      $region36: #{context_block.2} parent=11 // pred_fallthru
        _
      // Predicated region
      $region37: #{context_block.2} parent=11 // pred_check
        %p283 = pneg %p203
      $region38: #{context_block.2} parent=11 // pred_check_branch
        %285 = sbr.rel (%p283) target = $region40
      $region39: #{context_block.2} parent=11 // pred_region
        _
      $region40: #{context_block.2} parent=11 // pred_fallthru
        _
      // Predicated region
      $region41: #{context_block.2} parent=11 // pred_check
        %p286 = pneg %p224
      $region42: #{context_block.2} parent=11 // pred_check_branch
        %288 = sbr.rel (%p286) target = $region44
      $region43: #{context_block.2} parent=11 // pred_region
        _
      $region44: #{context_block.2} parent=11 // pred_fallthru
        _
    $region12: #{context_block.2} parent=5 // pred_fallthru
      _
    %p289 = scmp.lt.s32.totalorder %s16, 4
    // Predicated region
    $region45: #{context_block.2} parent=5 // pred_check
      %p290 = pneg %p289
    $region46: #{context_block.2} parent=5 // pred_check_branch
      %292 = sbr.rel (%p290) target = $region48
    $region47: #{context_block.2} parent=5 // pred_region
      // Predicated region
      $region49: #{context_block.2} parent=47 // pred_check
        %p293 = pneg %p50
      $region50: #{context_block.2} parent=47 // pred_check_branch
        %295 = sbr.rel (%p293) target = $region52
      $region51: #{context_block.2} parent=47 // pred_region
        %p296 = scmp.lt.s32.totalorder %s23, 1
        %s297 = scalar_select %p296, %s23, 1
        %p298 = scmp.lt.s32.totalorder %s24, 1
        %s299 = scalar_select %p298, %s24, 1
        %s300 = smul.addr %s297, 2
        %s301 = sadd.s32 %s299, %s300
        %s302 = smul.addr %s301, 8
        %s303 = scalar_lea.vmem %s0, %s302
      $region52: #{context_block.2} parent=47 // pred_fallthru
        _
    $region48: #{context_block.2} parent=5 // pred_fallthru
      _
    %p304 = scmp.le.s32.totalorder 1, %s16
    %p305 = scmp.lt.s32.totalorder %s16, 5
    %p306 = pnand %p304, %p305
    %p307 = pneg %p306
    // Predicated region
    $region53: #{context_block.2} parent=5 // pred_check
      _
    $region54: #{context_block.2} parent=5 // pred_check_branch
      %309 = sbr.rel (%p306) target = $region56
    $region55: #{context_block.2} parent=5 // pred_region
      %s310 = ssub.s32 %s16, 1
      %p311 = scmp.lt.s32.totalorder %s25, 1
      %s312 = scalar_select %p311, %s25, 1
      %p313 = scmp.lt.s32.totalorder %s26, 1
      %s314 = scalar_select %p313, %s26, 1
      %s315 = smul.addr %s312, 2
      %s316 = sadd.s32 %s314, %s315
      %s317 = smul.addr %s316, 8
      %s318 = scalar_lea.vmem %s0, %s317
      %p319 = pneg %p56
      %p320 = pneg %p53
      %p321 = pneg %p77
      %p322 = pneg %p74
      %p323 = pneg %p98
      %p324 = pneg %p95
      %p325 = pneg %p119
      %p326 = pneg %p116
      %p327 = pneg %p140
      %p328 = pneg %p137
      %p329 = pneg %p161
      %p330 = pneg %p158
      %p331 = pneg %p182
      %p332 = pneg %p179
      %p333 = pneg %p203
      %p334 = pneg %p200
      %p335 = pneg %p224
      %p336 = pneg %p221
      %p337 = pneg %p250
      %p338 = pneg %p247
      %p339 = scmp.lt.s32.totalorder %s25, 1
      %s340 = scalar_select %p339, %s25, 1
      %s341 = scalar_lea.vmem %s9, %s340
      %p342 = scmp.lt.s32.totalorder %s25, 1
      %s343 = scalar_select %p342, %s25, 1
      %p344 = scmp.lt.s32.totalorder %s26, 1
      %s345 = scalar_select %p344, %s26, 1
      %s346 = smul.addr %s343, 2
      %s347 = sadd.s32 %s345, %s346
      %s348 = smul.addr %s347, 8
      %s349 = scalar_lea.vmem %s0, %s348
      %p350 = scmp.lt.s32.totalorder %s25, 1
      %s351 = scalar_select %p350, %s25, 1
      %s352 = scalar_lea.vmem %s9, %s351
      %p353 = scmp.eq.s32.totalorder %s26, 0
      // Predicated region
      $region57: #{context_block.2} parent=55 // pred_check
        %p354 = pneg %p353
      $region58: #{context_block.2} parent=55 // pred_check_branch
        %356 = sbr.rel (%p354) target = $region60
      $region59: #{context_block.2} parent=55 // pred_region
        %vm357 = vcmask 0
        %358 = vst.msk [vmem:[#allocation2] sm:$0x1] %vm357, -inf
        %359 = vst.msk [vmem:[#allocation3] sm:$0x1] %vm357, 0.0
        %vm360 = vcmask 57344
        %361 = vst.msk [vmem:[#allocation4] sm:$0x1] %vm360, 0.0
      $region60: #{context_block.2} parent=55 // pred_fallthru
        _
      %v362 = vld [vmem:[%s349] sm:$0xff]
      %v363 = vld [vmem:[%s1] sm:$0x1]
      %s364 = sld [smem:[#allocation5]]
      %v365 = vstv %s364
      %vm366 = vcmask 64512
      %v368 = vsel %vm366, %v363, 0
      %370 = vmatprep.subr.mxu0 0.0
      %371 = vmatpush1.msra.mxu0 %v362
      %372 = vmatprep.subr.mxu0 0.0
      %373 = vmatpush1.msra.mxu0 0.0
      %374 = vmatprep.subr.mxu0 0.0
      %375 = vmatpush1.msra.mxu0 0.0
      %376 = vmatprep.subr.mxu0 0.0
      %377 = vmatpush1.msra.mxu0 0.0
      %378 = vmatprep.subr.mxu0 0.0
      %379 = vmatpush1.msra.mxu0 0.0
      %380 = vmatprep.subr.mxu0 0.0
      %381 = vmatpush1.msra.mxu0 0.0
      %382 = vmatprep.subr.mxu0 0.0
      %383 = vmatpush1.msra.mxu0 0.0
      %384 = vmatprep.subr.mxu0 0.0
      %385 = vmatpush1.msra.mxu0 0.0
      %386 = vmatprep.subr.mxu0 0.0
      %387 = vmatpush1.msra.mxu0 0.0
      %388 = vmatprep.subr.mxu0 0.0
      %389 = vmatpush1.msra.mxu0 0.0
      %390 = vmatprep.subr.mxu0 0.0
      %391 = vmatpush1.msra.mxu0 0.0
      %392 = vmatprep.subr.mxu0 0.0
      %393 = vmatpush1.msra.mxu0 0.0
      %394 = vmatprep.subr.mxu0 0.0
      %395 = vmatpush1.msra.mxu0 0.0
      %396 = vmatprep.subr.mxu0 0.0
      %397 = vmatpush1.msra.mxu0 0.0
      %398 = vmatprep.subr.mxu0 0.0
      %399 = vmatpush1.msra.mxu0 0.0
      %400 = vmatprep.subr.mxu0 0.0
      %401 = vmatpush1.msra.mxu0 0.0
      %402 = vmatprep.subr.mxu0 0.0
      %403 = vmatpush1.msra.mxu0 0.0
      %404 = vmatprep.subr.mxu0 0.0
      %405 = vmatpush1.msra.mxu0 0.0
      %406 = vmatprep.subr.mxu0 0.0
      %407 = vmatpush1.msra.mxu0 0.0
      %408 = vmatprep.subr.mxu0 0.0
      %409 = vmatpush1.msra.mxu0 0.0
      %410 = vmatprep.subr.mxu0 0.0
      %411 = vmatpush1.msra.mxu0 0.0
      %412 = vmatprep.subr.mxu0 0.0
      %413 = vmatpush1.msra.mxu0 0.0
      %414 = vmatprep.subr.mxu0 0.0
      %415 = vmatpush1.msra.mxu0 0.0
      %416 = vmatprep.subr.mxu0 0.0
      %417 = vmatpush1.msra.mxu0 0.0
      %418 = vmatprep.subr.mxu0 0.0
      %419 = vmatpush1.msra.mxu0 0.0
      %420 = vmatprep.subr.mxu0 0.0
      %421 = vmatpush1.msra.mxu0 0.0
      %422 = vmatprep.subr.mxu0 0.0
      %423 = vmatpush1.msra.mxu0 0.0
      %424 = vmatprep.subr.mxu0 0.0
      %425 = vmatpush1.msra.mxu0 0.0
      %426 = vmatprep.subr.mxu0 0.0
      %427 = vmatpush1.msra.mxu0 0.0
      %428 = vmatprep.subr.mxu0 0.0
      %429 = vmatpush1.msra.mxu0 0.0
      %430 = vmatprep.subr.mxu0 0.0
      %431 = vmatpush1.msra.mxu0 0.0
      %432 = vmatprep.subr.mxu0 0.0
      %433 = vmatpush1.msra.mxu0 0.0
      %434 = vmatprep.mubr.f32.mxu0 0.0
      %435 = vmatmul.mubr.f32.gmra.mrb[0].mxu0 %v368
      %v436 = vpop.f32.mrb[0].mxu0
      %v437 = vadd.f32 %v365, %v436
      %v438 = vpop.f32.mrb[0].mxu0
      %439 = vdwg.mxu0
      %v440 = vld [vmem:[#allocation2] sm:$0x1]
      %vm441 = vcmask 1040384
      %v442 = vsel %vm441, %v437, -inf
      %443 = vmax.xlane.f32.xlu0 %v442
      %v444 = vpop.xlane.xlu0 %443
      %v445 = vmax.f32 %v440, %v444
      %v446 = vsub.f32 %v440, %v445
      %v447 = vmul.f32 %v446, 1.442695
      %v448 = vpow.pop %v447
      %450 = vset.pattern.permute.xlu0 0
      %451 = vperm.xlu0 %450, %v445
      %v452 = vpop.permute.xlu0 %451
      %v454 = vlaneseq
      %v455 = vshrl.u32 %v454, 7
      %v456 = vsub.s32 0, %v455
      %v457 = vrot.slane %v452, %v456
      %v458 = vsub.f32 %v437, %v457
      %v459 = vmul.f32 %v458, 1.442695
      %v460 = vpow.pop %v459
      %v461 = vld [vmem:[#allocation3] sm:$0x1]
      %v462 = vmul.f32 %v448, %v461
      %v463 = vsel %vm441, %v460, 0.0
      %464 = vadd.xlane.f32.xlu0 %v463
      %v465 = vpop.xlane.xlu0 %464
      %v466 = vadd.f32 %v462, %v465
      %vm467 = vcmask 0
      %468 = vst.msk [vmem:[#allocation3] sm:$0x1] %vm467, %v466
      %469 = vmatprep.subr.mxu0 0.0
      %470 = vmatpush1.xpose.msra.mxu0 %v362
      %471 = vmatprep.subr.mxu0 0.0
      %472 = vmatpush1.xpose.msra.mxu0 0.0
      %473 = vmatprep.subr.mxu0 0.0
      %474 = vmatpush1.xpose.msra.mxu0 0.0
      %475 = vmatprep.subr.mxu0 0.0
      %476 = vmatpush1.xpose.msra.mxu0 0.0
      %477 = vmatprep.subr.mxu0 0.0
      %478 = vmatpush1.xpose.msra.mxu0 0.0
      %479 = vmatprep.subr.mxu0 0.0
      %480 = vmatpush1.xpose.msra.mxu0 0.0
      %481 = vmatprep.subr.mxu0 0.0
      %482 = vmatpush1.xpose.msra.mxu0 0.0
      %483 = vmatprep.subr.mxu0 0.0
      %484 = vmatpush1.xpose.msra.mxu0 0.0
      %485 = vmatprep.subr.mxu0 0.0
      %486 = vmatpush1.xpose.msra.mxu0 0.0
      %487 = vmatprep.subr.mxu0 0.0
      %488 = vmatpush1.xpose.msra.mxu0 0.0
      %489 = vmatprep.subr.mxu0 0.0
      %490 = vmatpush1.xpose.msra.mxu0 0.0
      %491 = vmatprep.subr.mxu0 0.0
      %492 = vmatpush1.xpose.msra.mxu0 0.0
      %493 = vmatprep.subr.mxu0 0.0
      %494 = vmatpush1.xpose.msra.mxu0 0.0
      %495 = vmatprep.subr.mxu0 0.0
      %496 = vmatpush1.xpose.msra.mxu0 0.0
      %497 = vmatprep.subr.mxu0 0.0
      %498 = vmatpush1.xpose.msra.mxu0 0.0
      %499 = vmatprep.subr.mxu0 0.0
      %500 = vmatpush1.xpose.msra.mxu0 0.0
      %501 = vmatprep.subr.mxu0 0.0
      %502 = vmatpush1.xpose.msra.mxu0 0.0
      %503 = vmatprep.subr.mxu0 0.0
      %504 = vmatpush1.xpose.msra.mxu0 0.0
      %505 = vmatprep.subr.mxu0 0.0
      %506 = vmatpush1.xpose.msra.mxu0 0.0
      %507 = vmatprep.subr.mxu0 0.0
      %508 = vmatpush1.xpose.msra.mxu0 0.0
      %509 = vmatprep.subr.mxu0 0.0
      %510 = vmatpush1.xpose.msra.mxu0 0.0
      %511 = vmatprep.subr.mxu0 0.0
      %512 = vmatpush1.xpose.msra.mxu0 0.0
      %513 = vmatprep.subr.mxu0 0.0
      %514 = vmatpush1.xpose.msra.mxu0 0.0
      %515 = vmatprep.subr.mxu0 0.0
      %516 = vmatpush1.xpose.msra.mxu0 0.0
      %517 = vmatprep.subr.mxu0 0.0
      %518 = vmatpush1.xpose.msra.mxu0 0.0
      %519 = vmatprep.subr.mxu0 0.0
      %520 = vmatpush1.xpose.msra.mxu0 0.0
      %521 = vmatprep.subr.mxu0 0.0
      %522 = vmatpush1.xpose.msra.mxu0 0.0
      %523 = vmatprep.subr.mxu0 0.0
      %524 = vmatpush1.xpose.msra.mxu0 0.0
      %525 = vmatprep.subr.mxu0 0.0
      %526 = vmatpush1.xpose.msra.mxu0 0.0
      %527 = vmatprep.subr.mxu0 0.0
      %528 = vmatpush1.xpose.msra.mxu0 0.0
      %529 = vmatprep.subr.mxu0 0.0
      %530 = vmatpush1.xpose.msra.mxu0 0.0
      %531 = vmatprep.subr.mxu0 0.0
      %532 = vmatpush1.xpose.msra.mxu0 0.0
      %533 = vmatprep.mubr.f32.mxu0 0.0
      %534 = vmatmul.mubr.f32.gmra.mrb[0].mxu0 %v460
      %v535 = vpop.f32.mrb[0].mxu0
      %v536 = vadd.f32 0.0, %v535
      %v537 = vpop.f32.mrb[0].mxu0
      %538 = vdwg.mxu0
      %v539 = vld [vmem:[#allocation4] sm:$0x1]
      %541 = vset.pattern.permute.xlu0 0
      %542 = vperm.xlu0 %541, %v448
      %v543 = vpop.permute.xlu0 %542
      %v545 = vlaneseq
      %v546 = vshrl.u32 %v545, 7
      %v547 = vsub.s32 0, %v546
      %v548 = vrot.slane %v543, %v547
      %v549 = vmul.f32 %v548, %v539
      %v550 = vadd.f32 %v549, %v536
      %vm551 = vcmask 57344
      %552 = vst.msk [vmem:[#allocation4] sm:$0x1] %vm551, %v550
      %553 = vst.msk [vmem:[#allocation2] sm:$0x1] %vm467, %v445
      %p554 = scmp.eq.s32.totalorder %s26, 1
      // Predicated region
      $region61: #{context_block.2} parent=55 // pred_check
        %p555 = pneg %p554
      $region62: #{context_block.2} parent=55 // pred_check_branch
        %557 = sbr.rel (%p555) target = $region64
      $region63: #{context_block.2} parent=55 // pred_region
        %v558 = vld [vmem:[#allocation4] sm:$0x1]
        %v559 = vld [vmem:[#allocation3] sm:$0x1]
        %v560 = vrcp.pop %v559
        %562 = vset.pattern.permute.xlu0 0
        %563 = vperm.xlu0 %562, %v560
        %v564 = vpop.permute.xlu0 %563
        %v566 = vlaneseq
        %v567 = vshrl.u32 %v566, 7
        %v568 = vsub.s32 0, %v567
        %v569 = vrot.slane %v564, %v568
        %v570 = vmul.f32 %v558, %v569
        %v571 = vld [vmem:[%s3] sm:$0xff]
        %v572 = vld [vmem:[%s4] sm:$0x1]
        %v574 = vsel %vm366, %v570, 0
        %576 = vmatprep.subr.mxu0 0.0
        %577 = vmatpush1.msra.mxu0 %v571
        %578 = vmatprep.subr.mxu0 0.0
        %579 = vmatpush1.msra.mxu0 0.0
        %580 = vmatprep.subr.mxu0 0.0
        %581 = vmatpush1.msra.mxu0 0.0
        %582 = vmatprep.subr.mxu0 0.0
        %583 = vmatpush1.msra.mxu0 0.0
        %584 = vmatprep.subr.mxu0 0.0
        %585 = vmatpush1.msra.mxu0 0.0
        %586 = vmatprep.subr.mxu0 0.0
        %587 = vmatpush1.msra.mxu0 0.0
        %588 = vmatprep.subr.mxu0 0.0
        %589 = vmatpush1.msra.mxu0 0.0
        %590 = vmatprep.subr.mxu0 0.0
        %591 = vmatpush1.msra.mxu0 0.0
        %592 = vmatprep.subr.mxu0 0.0
        %593 = vmatpush1.msra.mxu0 0.0
        %594 = vmatprep.subr.mxu0 0.0
        %595 = vmatpush1.msra.mxu0 0.0
        %596 = vmatprep.subr.mxu0 0.0
        %597 = vmatpush1.msra.mxu0 0.0
        %598 = vmatprep.subr.mxu0 0.0
        %599 = vmatpush1.msra.mxu0 0.0
        %600 = vmatprep.subr.mxu0 0.0
        %601 = vmatpush1.msra.mxu0 0.0
        %602 = vmatprep.subr.mxu0 0.0
        %603 = vmatpush1.msra.mxu0 0.0
        %604 = vmatprep.subr.mxu0 0.0
        %605 = vmatpush1.msra.mxu0 0.0
        %606 = vmatprep.subr.mxu0 0.0
        %607 = vmatpush1.msra.mxu0 0.0
        %608 = vmatprep.subr.mxu0 0.0
        %609 = vmatpush1.msra.mxu0 0.0
        %610 = vmatprep.subr.mxu0 0.0
        %611 = vmatpush1.msra.mxu0 0.0
        %612 = vmatprep.subr.mxu0 0.0
        %613 = vmatpush1.msra.mxu0 0.0
        %614 = vmatprep.subr.mxu0 0.0
        %615 = vmatpush1.msra.mxu0 0.0
        %616 = vmatprep.subr.mxu0 0.0
        %617 = vmatpush1.msra.mxu0 0.0
        %618 = vmatprep.subr.mxu0 0.0
        %619 = vmatpush1.msra.mxu0 0.0
        %620 = vmatprep.subr.mxu0 0.0
        %621 = vmatpush1.msra.mxu0 0.0
        %622 = vmatprep.subr.mxu0 0.0
        %623 = vmatpush1.msra.mxu0 0.0
        %624 = vmatprep.subr.mxu0 0.0
        %625 = vmatpush1.msra.mxu0 0.0
        %626 = vmatprep.subr.mxu0 0.0
        %627 = vmatpush1.msra.mxu0 0.0
        %628 = vmatprep.subr.mxu0 0.0
        %629 = vmatpush1.msra.mxu0 0.0
        %630 = vmatprep.subr.mxu0 0.0
        %631 = vmatpush1.msra.mxu0 0.0
        %632 = vmatprep.subr.mxu0 0.0
        %633 = vmatpush1.msra.mxu0 0.0
        %634 = vmatprep.subr.mxu0 0.0
        %635 = vmatpush1.msra.mxu0 0.0
        %636 = vmatprep.subr.mxu0 0.0
        %637 = vmatpush1.msra.mxu0 0.0
        %638 = vmatprep.subr.mxu0 0.0
        %639 = vmatpush1.msra.mxu0 0.0
        %640 = vmatprep.mubr.f32.mxu0 0.0
        %641 = vmatmul.mubr.f32.gmra.mrb[0].mxu0 %v574
        %v642 = vpop.f32.mrb[0].mxu0
        %v643 = vadd.f32 %v572, %v642
        %v644 = vpop.f32.mrb[0].mxu0
        %645 = vdwg.mxu0
        %vm646 = vcmask 8192
        %v647 = vsel %vm646, %v643, 0.0
        %648 = vadd.xlane.f32.xlu0 %v647
        %v649 = vpop.xlane.xlu0 %648
        %v650 = vrcp.pop 2.0
        %v651 = vmul.f32 %v649, %v650
        %v652 = vsub.f32 %v643, %v651
        %v653 = vmul.f32 %v652, %v652
        %v654 = vsel %vm646, %v653, 0.0
        %655 = vadd.xlane.f32.xlu0 %v654
        %v656 = vpop.xlane.xlu0 %655
        %v657 = vmul.f32 %v656, %v650
        %v658 = vadd.f32 %v657, 1e-05
        %v659 = vrsqrt.pop %v658
        %v660 = vmul.f32 %v652, %v659
        %v661 = vld [vmem:[%s5] sm:$0x1]
        %v662 = vmul.f32 %v660, %v661
        %v663 = vld [vmem:[%s6] sm:$0x1]
        %v664 = vadd.f32 %v662, %v663
        %v665 = vmax.f32 %v664, 0.0
        %v666 = vld [vmem:[%s7] sm:$0xff]
        %v667 = vld [vmem:[%s8] sm:$0x1]
        %vm668 = vcmask 15360
        %v670 = vsel %vm668, %v665, 0
        %v673 = vsel %vm668, %v666, 0
        %675 = vmatprep.subr.mxu0 0.0
        %676 = vmatpush1.xpose.msra.mxu0 %v673
        %677 = vmatprep.subr.mxu0 0.0
        %678 = vmatpush1.xpose.msra.mxu0 0.0
        %679 = vmatprep.subr.mxu0 0.0
        %680 = vmatpush1.xpose.msra.mxu0 0.0
        %681 = vmatprep.subr.mxu0 0.0
        %682 = vmatpush1.xpose.msra.mxu0 0.0
        %683 = vmatprep.subr.mxu0 0.0
        %684 = vmatpush1.xpose.msra.mxu0 0.0
        %685 = vmatprep.subr.mxu0 0.0
        %686 = vmatpush1.xpose.msra.mxu0 0.0
        %687 = vmatprep.subr.mxu0 0.0
        %688 = vmatpush1.xpose.msra.mxu0 0.0
        %689 = vmatprep.subr.mxu0 0.0
        %690 = vmatpush1.xpose.msra.mxu0 0.0
        %691 = vmatprep.subr.mxu0 0.0
        %692 = vmatpush1.xpose.msra.mxu0 0.0
        %693 = vmatprep.subr.mxu0 0.0
        %694 = vmatpush1.xpose.msra.mxu0 0.0
        %695 = vmatprep.subr.mxu0 0.0
        %696 = vmatpush1.xpose.msra.mxu0 0.0
        %697 = vmatprep.subr.mxu0 0.0
        %698 = vmatpush1.xpose.msra.mxu0 0.0
        %699 = vmatprep.subr.mxu0 0.0
        %700 = vmatpush1.xpose.msra.mxu0 0.0
        %701 = vmatprep.subr.mxu0 0.0
        %702 = vmatpush1.xpose.msra.mxu0 0.0
        %703 = vmatprep.subr.mxu0 0.0
        %704 = vmatpush1.xpose.msra.mxu0 0.0
        %705 = vmatprep.subr.mxu0 0.0
        %706 = vmatpush1.xpose.msra.mxu0 0.0
        %707 = vmatprep.subr.mxu0 0.0
        %708 = vmatpush1.xpose.msra.mxu0 0.0
        %709 = vmatprep.subr.mxu0 0.0
        %710 = vmatpush1.xpose.msra.mxu0 0.0
        %711 = vmatprep.subr.mxu0 0.0
        %712 = vmatpush1.xpose.msra.mxu0 0.0
        %713 = vmatprep.subr.mxu0 0.0
        %714 = vmatpush1.xpose.msra.mxu0 0.0
        %715 = vmatprep.subr.mxu0 0.0
        %716 = vmatpush1.xpose.msra.mxu0 0.0
        %717 = vmatprep.subr.mxu0 0.0
        %718 = vmatpush1.xpose.msra.mxu0 0.0
        %719 = vmatprep.subr.mxu0 0.0
        %720 = vmatpush1.xpose.msra.mxu0 0.0
        %721 = vmatprep.subr.mxu0 0.0
        %722 = vmatpush1.xpose.msra.mxu0 0.0
        %723 = vmatprep.subr.mxu0 0.0
        %724 = vmatpush1.xpose.msra.mxu0 0.0
        %725 = vmatprep.subr.mxu0 0.0
        %726 = vmatpush1.xpose.msra.mxu0 0.0
        %727 = vmatprep.subr.mxu0 0.0
        %728 = vmatpush1.xpose.msra.mxu0 0.0
        %729 = vmatprep.subr.mxu0 0.0
        %730 = vmatpush1.xpose.msra.mxu0 0.0
        %731 = vmatprep.subr.mxu0 0.0
        %732 = vmatpush1.xpose.msra.mxu0 0.0
        %733 = vmatprep.subr.mxu0 0.0
        %734 = vmatpush1.xpose.msra.mxu0 0.0
        %735 = vmatprep.subr.mxu0 0.0
        %736 = vmatpush1.xpose.msra.mxu0 0.0
        %737 = vmatprep.subr.mxu0 0.0
        %738 = vmatpush1.xpose.msra.mxu0 0.0
        %739 = vmatprep.mubr.f32.mxu0 0.0
        %740 = vmatmul.mubr.f32.gmra.mrb[0].mxu0 %v670
        %v741 = vpop.f32.mrb[0].mxu0
        %v742 = vadd.f32 %v667, %v741
        %v743 = vpop.f32.mrb[0].mxu0
        %744 = vdwg.mxu0
        %v745 = vxor.u32 %v742, 2147483648
        %v746 = vmul.f32 %v745, 1.442695
        %v747 = vpow.pop %v746
        %v748 = vadd.f32 %v747, 1.0
        %v749 = vrcp.pop %v748
        %v750 = vmul.f32 1.0, %v749
        %v751 = vadd.f32 %v750, 1.0
        %752 = vst.msk [vmem:[%s352] sm:$0x1] %vm551, %v751
      $region64: #{context_block.2} parent=55 // pred_fallthru
        _
      %p753 = scmp.lt.s32.totalorder %s25, 1
      %s754 = scalar_select %p753, %s25, 1
      %s755 = scalar_lea.vmem %s9, %s754
      // Predicated region
      $region65: #{context_block.2} parent=55 // pred_check
        %p756 = pneg %p247
      $region66: #{context_block.2} parent=55 // pred_check_branch
        %758 = sbr.rel (%p756) target = $region68
      $region67: #{context_block.2} parent=55 // pred_region
        _
      $region68: #{context_block.2} parent=55 // pred_fallthru
        _
    $region56: #{context_block.2} parent=5 // pred_fallthru
      _
    %p759 = scmp.le.s32.totalorder 2, %s16
    // Predicated region
    $region69: #{context_block.2} parent=5 // pred_check
      %p760 = pneg %p759
    $region70: #{context_block.2} parent=5 // pred_check_branch
      %762 = sbr.rel (%p760) target = $region72
    $region71: #{context_block.2} parent=5 // pred_region
      %s763 = ssub.s32 %s16, 2
      // Predicated region
      $region73: #{context_block.2} parent=71 // pred_check
        %p764 = pneg %p253
      $region74: #{context_block.2} parent=71 // pred_check_branch
        %766 = sbr.rel (%p764) target = $region76
      $region75: #{context_block.2} parent=71 // pred_region
        %p767 = scmp.lt.s32.totalorder %s27, 1
        %s768 = scalar_select %p767, %s27, 1
        %s769 = scalar_lea.vmem %s9, %s768
      $region76: #{context_block.2} parent=71 // pred_fallthru
        _
    $region72: #{context_block.2} parent=5 // pred_fallthru
      _
  $region6: #{context_block.2} parent=0 // loop_footer
    %s20 = sadd.s32 1, %s16
  $region7: #{context_block.2} parent=0 // loop_footer_branch
    %15 = sbr.rel target = $region3
  $region8: #{context_block.2} parent=0 // loop_exit
    _

</llo_original>
